<compile_context>
chip_gen: v7x
topology: tpu7x:2x2x1
jax: 0.10.0
libtpu: 0.0.40
codegen_flags: <defaults>
</compile_context>

<pallas_src>
import math

import jax
import jax.numpy as jnp
from jax.experimental import pallas as pl
from jax.experimental.pallas import tpu as pltpu


def _fused_kernel(x0_ref, x1_ref, w0_ref, w1_ref, b01_ref, w2_ref, o_ref):
    # x0_ref, x1_ref : (1, C_in,  TP)   pixel tile of each input (one batch elem)
    # w0_ref, w1_ref : (C_out, C_in)    1x1 conv weights with BN scale folded in
    # b01_ref        : (C_out, 1)       combined folded BN shifts (b0 + b1)
    # w2_ref         : (C_out, C_out)   final 1x1 conv weight
    # o_ref          : (1, C_out, TP)
    x0 = x0_ref[0]                       # (C_in, TP), already f32 -- no cast
    x1 = x1_ref[0]

    # branch 0 + branch 1 (BN scale is pre-folded into the weights)
    y = jnp.dot(w0_ref[...], x0, preferred_element_type=jnp.float32)
    y = y + jnp.dot(w1_ref[...], x1, preferred_element_type=jnp.float32)

    # merged BN shifts, ReLU, final 1x1 conv
    y = jnp.maximum(y + b01_ref[...], 0.0)
    y = jnp.dot(w2_ref[...], y, preferred_element_type=jnp.float32)

    # residual attention: multiply by x0 (requires C_in == C_out)
    o_ref[0] = (y * x0).astype(o_ref.dtype)


def residual_attention_layer_pallas(x0, x1, params, *, tile_p=512):
    """x0, x1: (N, C, H, W) float32.  params: dict of weights (see make_params)."""
    N, C, H, W = x0.shape
    C_out = params["w2"].shape[0]
    assert C_out == C, (
        "residual multiply (final_layer(y2) * x0) requires "
        "input_channels == output_channels")
    HW = H * W

    # Fold BN scale into conv weights; merge both shifts into one bias.
    w0f = params["w0"] * params["s0"]          # (C_out, C_in)
    w1f = params["w1"] * params["s1"]          # (C_out, C_in)
    b01 = params["b0"] + params["b1"]          # (C_out, 1)
    w2 = params["w2"]                          # (C_out, C_out)

    # NCHW -> (N, C, H*W): free reshape, no transpose, no extra HBM pass.
    x0r = x0.reshape(N, C, HW)
    x1r = x1.reshape(N, C, HW)

    # Pick a lane-dense pixel tile; pad the pixel axis only if required.
    if HW <= tile_p:
        tile_p = HW                             # full extent -> always legal
        hw_pad = HW
    else:
        tile_p = max(128, (tile_p // 128) * 128)
        hw_pad = math.ceil(HW / tile_p) * tile_p
    if hw_pad != HW:
        pad = ((0, 0), (0, 0), (0, hw_pad - HW))
        x0r = jnp.pad(x0r, pad)
        x1r = jnp.pad(x1r, pad)

    grid = (N, hw_pad // tile_p)

    def pix_spec(c):
        return pl.BlockSpec((1, c, tile_p), lambda n, i: (n, 0, i))

    def full_spec(shape):
        return pl.BlockSpec(shape, lambda n, i: (0, 0))

    itemsize = jnp.dtype(x0.dtype).itemsize
    cost = pl.CostEstimate(
        flops=N * HW * (4 * C * C_out + 2 * C_out * C_out + 3 * C_out),
        transcendentals=0,
        bytes_accessed=(2 * C + C_out) * N * HW * itemsize
        + (2 * C * C_out + C_out * C_out + C_out) * 4,
    )

    out = pl.pallas_call(
        _fused_kernel,
        out_shape=jax.ShapeDtypeStruct((N, C_out, hw_pad), x0.dtype),
        grid_spec=pltpu.PrefetchScalarGridSpec(
            num_scalar_prefetch=0,
            grid=grid,
            in_specs=[
                pix_spec(C),                 # x0 tile
                pix_spec(C),                 # x1 tile
                full_spec(w0f.shape),        # w0 (BN-folded)
                full_spec(w1f.shape),        # w1 (BN-folded)
                full_spec(b01.shape),        # combined bias
                full_spec(w2.shape),         # w2
            ],
            out_specs=pix_spec(C_out),
        ),
        compiler_params=pltpu.CompilerParams(
            dimension_semantics=("parallel", "parallel")),
        cost_estimate=cost,
    )(x0r, x1r, w0f, w1f, b01, w2)

    # (N, C_out, HW_pad) -> NCHW: drop padding (no-op if none), free reshape.
    return out[:, :, :HW].reshape(N, C_out, H, W)


def make_params(key, c_in, c_out, eps=1e-5):
    """Deterministic parameter init. 1x1 convs -> (C_out, C_in) matrices;
    BatchNorm (eval mode) folded to scale/shift of shape (C_out, 1)."""
    ks = jax.random.split(key, 11)
    w0 = jax.random.normal(ks[0], (c_out, c_in), jnp.float32) * 0.5
    w1 = jax.random.normal(ks[1], (c_out, c_in), jnp.float32) * 0.5
    w2 = jax.random.normal(ks[2], (c_out, c_out), jnp.float32) * 0.5

    def bn(kg, kb, km, kv):
        gamma = 1.0 + 0.1 * jax.random.normal(kg, (c_out, 1), jnp.float32)
        beta = 0.1 * jax.random.normal(kb, (c_out, 1), jnp.float32)
        mean = 0.1 * jax.random.normal(km, (c_out, 1), jnp.float32)
        var = jnp.abs(jax.random.normal(kv, (c_out, 1), jnp.float32)) + 0.5
        scale = gamma / jnp.sqrt(var + eps)
        shift = beta - mean * scale
        return scale, shift

    s0, b0 = bn(ks[3], ks[4], ks[5], ks[6])
    s1, b1 = bn(ks[7], ks[8], ks[9], ks[10])
    return dict(w0=w0, s0=s0, b0=b0, w1=w1, s1=s1, b1=b1, w2=w2)


def reference(x0, x1, p):
    """Plain-JAX reference of the same forward pass (NCHW, 1x1 convs)."""
    def conv1x1(x, w):
        return jnp.einsum('oc,nchw->nohw', w, x)
    y0 = conv1x1(x0, p["w0"]) * p["s0"][None, :, :, None] + p["b0"][None, :, :, None]
    y1 = conv1x1(x1, p["w1"]) * p["s1"][None, :, :, None] + p["b1"][None, :, :, None]
    y2 = jnp.maximum(y0 + y1, 0.0)
    return conv1x1(y2, p["w2"]) * x0


if __name__ == "__main__":
    key = jax.random.PRNGKey(0)
    k_x0, k_x1, k_p = jax.random.split(key, 3)

    N, C, H, W = 2, 4, 16, 16          # input_channels = output_channels = 4
    x0 = jax.random.normal(k_x0, (N, C, H, W), jnp.float32)
    x1 = jax.random.normal(k_x1, (N, C, H, W), jnp.float32)
    params = make_params(k_p, C, C)

    out = residual_attention_layer_pallas(x0, x1, params)
    out = jax.block_until_ready(out)

    ref = reference(x0, x1, params)
    assert out.shape == (N, C, H, W)
    assert jnp.allclose(out, ref, atol=1e-4, rtol=1e-4), "mismatch vs reference"

    print("KERNEL_OK")
</pallas_src>

<mosaic_0001>
module attributes {stable_mosaic.version = 11 : i64} {
  func.func @_fused_kernel(%arg0: i32, %arg1: i32, %arg2: memref<1x4x256xf32, #tpu.memory_space<vmem>>, %arg3: memref<1x4x256xf32, #tpu.memory_space<vmem>>, %arg4: memref<4x4xf32, #tpu.memory_space<vmem>>, %arg5: memref<4x4xf32, #tpu.memory_space<vmem>>, %arg6: memref<4x1xf32, #tpu.memory_space<vmem>>, %arg7: memref<4x4xf32, #tpu.memory_space<vmem>>, %arg8: memref<1x4x256xf32, #tpu.memory_space<vmem>>) attributes {dimension_semantics = [#tpu.dimension_semantics<parallel>, #tpu.dimension_semantics<parallel>], iteration_bounds = array<i64: 2, 1>, scalar_prefetch = 0 : i64, scratch_operands = 0 : i64, tpu.core_type = #tpu.core_type<tc>, window_params = [{transform_indices = @transform_0, window_bounds = array<i64: 1, 4, 256>}, {transform_indices = @transform_1, window_bounds = array<i64: 1, 4, 256>}, {pipeline_mode = #tpu.pipeline_mode<synchronous>, transform_indices = @transform_2, window_bounds = array<i64: 4, 4>}, {pipeline_mode = #tpu.pipeline_mode<synchronous>, transform_indices = @transform_3, window_bounds = array<i64: 4, 4>}, {pipeline_mode = #tpu.pipeline_mode<synchronous>, transform_indices = @transform_4, window_bounds = array<i64: 4, 1>}, {pipeline_mode = #tpu.pipeline_mode<synchronous>, transform_indices = @transform_5, window_bounds = array<i64: 4, 4>}, {transform_indices = @transform_6, window_bounds = array<i64: 1, 4, 256>}]} {
    %c0 = arith.constant 0 : index
    %c0_0 = arith.constant 0 : index
    %c0_1 = arith.constant 0 : index
    %0 = vector.load %arg2[%c0, %c0_0, %c0_1] : memref<1x4x256xf32, #tpu.memory_space<vmem>>, vector<1x4x256xf32>
    %1 = vector.shape_cast %0 : vector<1x4x256xf32> to vector<4x256xf32>
    %c0_2 = arith.constant 0 : index
    %c0_3 = arith.constant 0 : index
    %c0_4 = arith.constant 0 : index
    %2 = vector.load %arg3[%c0_2, %c0_3, %c0_4] : memref<1x4x256xf32, #tpu.memory_space<vmem>>, vector<1x4x256xf32>
    %3 = vector.shape_cast %2 : vector<1x4x256xf32> to vector<4x256xf32>
    %c0_5 = arith.constant 0 : index
    %c0_6 = arith.constant 0 : index
    %4 = vector.load %arg4[%c0_5, %c0_6] : memref<4x4xf32, #tpu.memory_space<vmem>>, vector<4x4xf32>
    %cst = arith.constant dense<0.000000e+00> : vector<4x256xf32>
    %5 = tpu.matmul %4, %1, %cst {dimension_numbers = #tpu.dot_dimension_numbers<[1], [0], [0], [1], [0, 0, 1, 1], [], []>} : vector<4x4xf32>, vector<4x256xf32>, vector<4x256xf32> -> vector<4x256xf32>
    %c0_7 = arith.constant 0 : index
    %c0_8 = arith.constant 0 : index
    %6 = vector.load %arg5[%c0_7, %c0_8] : memref<4x4xf32, #tpu.memory_space<vmem>>, vector<4x4xf32>
    %cst_9 = arith.constant dense<0.000000e+00> : vector<4x256xf32>
    %7 = tpu.matmul %6, %3, %cst_9 {dimension_numbers = #tpu.dot_dimension_numbers<[1], [0], [0], [1], [0, 0, 1, 1], [], []>} : vector<4x4xf32>, vector<4x256xf32>, vector<4x256xf32> -> vector<4x256xf32>
    %8 = arith.addf %5, %7 : vector<4x256xf32>
    %c0_10 = arith.constant 0 : index
    %c0_11 = arith.constant 0 : index
    %9 = vector.load %arg6[%c0_10, %c0_11] : memref<4x1xf32, #tpu.memory_space<vmem>>, vector<4x1xf32>
    %10 = vector.broadcast %9 : vector<4x1xf32> to vector<4x256xf32>
    %11 = arith.addf %8, %10 : vector<4x256xf32>
    %cst_12 = arith.constant 0.000000e+00 : f32
    %12 = vector.broadcast %cst_12 : f32 to vector<4x256xf32>
    %13 = arith.maximumf %11, %12 : vector<4x256xf32>
    %c0_13 = arith.constant 0 : index
    %c0_14 = arith.constant 0 : index
    %14 = vector.load %arg7[%c0_13, %c0_14] : memref<4x4xf32, #tpu.memory_space<vmem>>, vector<4x4xf32>
    %cst_15 = arith.constant dense<0.000000e+00> : vector<4x256xf32>
    %15 = tpu.matmul %14, %13, %cst_15 {dimension_numbers = #tpu.dot_dimension_numbers<[1], [0], [0], [1], [0, 0, 1, 1], [], []>} : vector<4x4xf32>, vector<4x256xf32>, vector<4x256xf32> -> vector<4x256xf32>
    %16 = arith.mulf %15, %1 : vector<4x256xf32>
    %c0_16 = arith.constant 0 : index
    %c0_17 = arith.constant 0 : index
    %c0_18 = arith.constant 0 : index
    %17 = vector.load %arg8[%c0_16, %c0_17, %c0_18] : memref<1x4x256xf32, #tpu.memory_space<vmem>>, vector<1x4x256xf32>
    %18 = vector.shape_cast %17 : vector<1x4x256xf32> to vector<4x256xf32>
    %19 = vector.shape_cast %16 : vector<4x256xf32> to vector<1x4x256xf32>
    tpu.vector_store %arg8[%c0_16, %c0_17, %c0_18], %19 {strides = array<i32>} : memref<1x4x256xf32, #tpu.memory_space<vmem>>, vector<1x4x256xf32>,
    return
  }
  func.func @transform_0(%arg0: i32, %arg1: i32) -> (i32, i32, i32) {
    %c0_i32 = arith.constant 0 : i32
    %c0_i32_0 = arith.constant 0 : i32
    return %arg0, %c0_i32, %arg1 : i32, i32, i32
  }
  func.func @transform_1(%arg0: i32, %arg1: i32) -> (i32, i32, i32) {
    %c0_i32 = arith.constant 0 : i32
    %c0_i32_0 = arith.constant 0 : i32
    return %arg0, %c0_i32, %arg1 : i32, i32, i32
  }
  func.func @transform_2(%arg0: i32, %arg1: i32) -> (i32, i32) {
    %c0_i32 = arith.constant 0 : i32
    %c0_i32_0 = arith.constant 0 : i32
    %c0_i32_1 = arith.constant 0 : i32
    return %c0_i32, %c0_i32_0 : i32, i32
  }
  func.func @transform_3(%arg0: i32, %arg1: i32) -> (i32, i32) {
    %c0_i32 = arith.constant 0 : i32
    %c0_i32_0 = arith.constant 0 : i32
    %c0_i32_1 = arith.constant 0 : i32
    return %c0_i32, %c0_i32_0 : i32, i32
  }
  func.func @transform_4(%arg0: i32, %arg1: i32) -> (i32, i32) {
    %c0_i32 = arith.constant 0 : i32
    %c0_i32_0 = arith.constant 0 : i32
    %c0_i32_1 = arith.constant 0 : i32
    return %c0_i32, %c0_i32_0 : i32, i32
  }
  func.func @transform_5(%arg0: i32, %arg1: i32) -> (i32, i32) {
    %c0_i32 = arith.constant 0 : i32
    %c0_i32_0 = arith.constant 0 : i32
    %c0_i32_1 = arith.constant 0 : i32
    return %c0_i32, %c0_i32_0 : i32, i32
  }
  func.func @transform_6(%arg0: i32, %arg1: i32) -> (i32, i32, i32) {
    %c0_i32 = arith.constant 0 : i32
    %c0_i32_0 = arith.constant 0 : i32
    return %arg0, %c0_i32, %arg1 : i32, i32, i32
  }
}

</mosaic_0001>

<llo_original>
// kernel: tpu_custom_call.1
$region0: #{tpu_custom_call.1}
  #allocation0 [shape = 'u32[]', space=smem, size = 0x4, offset = 0x4, fixed_abs, tag = 'smem constant byte address 0x4 - core index']
  #allocation1 [shape = 'u32[144,128]{1,0:T(1,128)}', space=vmem, size = 0x12000, scoped, tag = 'internal scratch']
  %s0 = inlined_call_operand.hbm [shape: f32[2,4,256], index: 0, kind: input, shape index: {}]
  %s1 = inlined_call_operand.hbm [shape: f32[2,4,256], index: 1, kind: input, shape index: {}]
  %s2 = inlined_call_operand.vmem [shape: f32[4,4], index: 2, kind: input, shape index: {}]
  %s3 = inlined_call_operand.vmem [shape: f32[4,4], index: 3, kind: input, shape index: {}]
  %s4 = inlined_call_operand.vmem [shape: f32[4,1], index: 4, kind: input, shape index: {}]
  %s5 = inlined_call_operand.vmem [shape: f32[4,4], index: 5, kind: input, shape index: {}]
  %s6 = inlined_call_operand.hbm [shape: f32[2,4,256], index: 6, kind: output, shape index: {}]
  %s7 = sld [smem:[#allocation0]]
  $region65: #{tpu_custom_call.1} parent=0
    _
  %s9 = ssub.s32 1, %s7
  %s10 = scalar_select 0, %s9, %s7
  $region1: #{tpu_custom_call.1} parent=0
    #allocation2 [shape = 'u8[8192]{0}', space=vmem, size = 0x2000, scoped, tag = 'input window, operand 0']
    #allocation3 [shape = 's32[2]{0}', space=sflag, size = 0x8, scoped, tag = 'scoped memory for tpu_custom_call.1']
    #allocation4 [shape = 's32[2]{0}', space=sflag, size = 0x8, scoped, tag = 'scoped memory for tpu_custom_call.1']
    #allocation5 [shape = 'u8[8192]{0}', space=vmem, size = 0x2000, scoped, tag = 'input window, operand 1']
    #allocation6 [shape = 's32[2]{0}', space=sflag, size = 0x8, scoped, tag = 'scoped memory for tpu_custom_call.1']
    #allocation7 [shape = 'u8[8192]{0}', space=vmem, size = 0x2000, scoped, tag = 'output window, operand 0']
    %11 = vsyncpa [#allocation3], 0
    %s12 = scalar_lea.sflag [#allocation3], 1
    %13 = vsyncpa %s12, 0
    %14 = vsyncpa [#allocation6], 0
    %s15 = scalar_lea.sflag [#allocation6], 1
    %16 = vsyncpa %s15, 0
    %17 = vsyncpa [#allocation4], 0
    %s18 = scalar_lea.sflag [#allocation4], 1
    %19 = vsyncpa %s18, 0
    loop: start=0, step=1, limit=4
    $region2: #{tpu_custom_call.1} parent=1 // loop_pre_header
      _
    $region3: #{tpu_custom_call.1} parent=1 // loop_header
      %s21 = sphi 0, %s25
      %p22 = scmp.ge.s32.totalorder %s21, 4
      %s28 = sphi 0, %s40
      %s29 = sphi 0, %s36
      %s30 = sphi 0, %s28
      %s31 = sphi 0, %s29
      %s32 = sphi 0, %s30
      %s33 = sphi 0, %s31
      %s45 = sphi 0, %s47
      %s48 = sphi 0, %s45
      %s49 = sphi 0, %s48
      %s65 = sphi 0, %s49
      %s73 = sphi 0, %s75
      %s76 = sphi 0, %s73
      %s77 = sphi 0, %s76
      %s93 = sphi 0, %s77
      %s97 = sphi 0, %s97
      %s99 = sphi 0, %s97
      %s100 = sphi 0, %s99
      %s114 = sphi 0, %s100
      %s118 = sphi 0, %s118
      %s120 = sphi 0, %s118
      %s121 = sphi 0, %s120
      %s135 = sphi 0, %s121
      %s139 = sphi 0, %s139
      %s141 = sphi 0, %s139
      %s142 = sphi 0, %s141
      %s156 = sphi 0, %s142
      %s160 = sphi 0, %s160
      %s162 = sphi 0, %s160
      %s163 = sphi 0, %s162
      %s177 = sphi 0, %s163
      %s185 = sphi 0, %s187
      %s188 = sphi 0, %s185
      %s189 = sphi 0, %s188
      %s205 = sphi 0, %s189
    $region4: #{tpu_custom_call.1} parent=1 // loop_header_branch
      %24 = sbr.rel (%p22) target = $region8
    $region5: #{tpu_custom_call.1} parent=1 // loop_body
      %s26 = ssub.s32 %s21, 1
      %s27 = ssub.s32 %s21, 2
      %s34 = sadd.s32 1, %s29
      %p35 = scmp.ge.s32.totalorder %s34, 1
      %s36 = scalar_select %p35, 0, %s34
      %s37 = sadd.s32 1, %s28
      %s38 = scalar_select %p35, %s37, %s28
      %p39 = scmp.ge.s32.totalorder %s38, 2
      %s40 = scalar_select %p39, 0, %s38
      %s41 = ssub.s32 %s28, %s40
      %s42 = ssub.s32 %s29, %s36
      %s43 = sor.u32 %s41, %s42
      %p44 = scmp.eq.s32.totalorder %s43, 0
      %s46 = sadd.s32 %s45, 1
      %s47 = scalar_select %p44, %s45, %s46
      %p50 = pneg %p44
      %p51 = scmp.eq.s32.totalorder %s21, 1
      %p52 = por %p50, %p51
      %p53 = scmp.ne.s32.totalorder %s45, %s48
      %p54 = scmp.eq.s32.totalorder %s21, 0
      %p55 = por %p53, %p54
      %p56 = scmp.ne.s32.totalorder %s45, %s48
      %p57 = scmp.eq.s32.totalorder %s26, 1
      %p58 = por %p56, %p57
      %p59 = scmp.ne.s32.totalorder %s48, %s49
      %p60 = scmp.eq.s32.totalorder %s26, 0
      %p61 = por %p59, %p60
      %p62 = scmp.ne.s32.totalorder %s48, %s49
      %p63 = scmp.eq.s32.totalorder %s27, 1
      %p64 = por %p62, %p63
      %p66 = scmp.ne.s32.totalorder %s49, %s65
      %p67 = scmp.eq.s32.totalorder %s27, 0
      %p68 = por %p66, %p67
      %s69 = ssub.s32 %s28, %s40
      %s70 = ssub.s32 %s29, %s36
      %s71 = sor.u32 %s69, %s70
      %p72 = scmp.eq.s32.totalorder %s71, 0
      %s74 = sadd.s32 %s73, 1
      %s75 = scalar_select %p72, %s73, %s74
      %p78 = pneg %p72
      %p79 = scmp.eq.s32.totalorder %s21, 1
      %p80 = por %p78, %p79
      %p81 = scmp.ne.s32.totalorder %s73, %s76
      %p82 = scmp.eq.s32.totalorder %s21, 0
      %p83 = por %p81, %p82
      %p84 = scmp.ne.s32.totalorder %s73, %s76
      %p85 = scmp.eq.s32.totalorder %s26, 1
      %p86 = por %p84, %p85
      %p87 = scmp.ne.s32.totalorder %s76, %s77
      %p88 = scmp.eq.s32.totalorder %s26, 0
      %p89 = por %p87, %p88
      %p90 = scmp.ne.s32.totalorder %s76, %s77
      %p91 = scmp.eq.s32.totalorder %s27, 1
      %p92 = por %p90, %p91
      %p94 = scmp.ne.s32.totalorder %s77, %s93
      %p95 = scmp.eq.s32.totalorder %s27, 0
      %p96 = por %p94, %p95
      %s98 = sadd.s32 %s97, 1
      %p101 = scmp.eq.s32.totalorder %s21, 1
      %p102 = scmp.ne.s32.totalorder %s97, %s99
      %p103 = scmp.eq.s32.totalorder %s21, 0
      %p104 = por %p102, %p103
      %p105 = scmp.ne.s32.totalorder %s97, %s99
      %p106 = scmp.eq.s32.totalorder %s26, 1
      %p107 = por %p105, %p106
      %p108 = scmp.ne.s32.totalorder %s99, %s100
      %p109 = scmp.eq.s32.totalorder %s26, 0
      %p110 = por %p108, %p109
      %p111 = scmp.ne.s32.totalorder %s99, %s100
      %p112 = scmp.eq.s32.totalorder %s27, 1
      %p113 = por %p111, %p112
      %p115 = scmp.ne.s32.totalorder %s100, %s114
      %p116 = scmp.eq.s32.totalorder %s27, 0
      %p117 = por %p115, %p116
      %s119 = sadd.s32 %s118, 1
      %p122 = scmp.eq.s32.totalorder %s21, 1
      %p123 = scmp.ne.s32.totalorder %s118, %s120
      %p124 = scmp.eq.s32.totalorder %s21, 0
      %p125 = por %p123, %p124
      %p126 = scmp.ne.s32.totalorder %s118, %s120
      %p127 = scmp.eq.s32.totalorder %s26, 1
      %p128 = por %p126, %p127
      %p129 = scmp.ne.s32.totalorder %s120, %s121
      %p130 = scmp.eq.s32.totalorder %s26, 0
      %p131 = por %p129, %p130
      %p132 = scmp.ne.s32.totalorder %s120, %s121
      %p133 = scmp.eq.s32.totalorder %s27, 1
      %p134 = por %p132, %p133
      %p136 = scmp.ne.s32.totalorder %s121, %s135
      %p137 = scmp.eq.s32.totalorder %s27, 0
      %p138 = por %p136, %p137
      %s140 = sadd.s32 %s139, 1
      %p143 = scmp.eq.s32.totalorder %s21, 1
      %p144 = scmp.ne.s32.totalorder %s139, %s141
      %p145 = scmp.eq.s32.totalorder %s21, 0
      %p146 = por %p144, %p145
      %p147 = scmp.ne.s32.totalorder %s139, %s141
      %p148 = scmp.eq.s32.totalorder %s26, 1
      %p149 = por %p147, %p148
      %p150 = scmp.ne.s32.totalorder %s141, %s142
      %p151 = scmp.eq.s32.totalorder %s26, 0
      %p152 = por %p150, %p151
      %p153 = scmp.ne.s32.totalorder %s141, %s142
      %p154 = scmp.eq.s32.totalorder %s27, 1
      %p155 = por %p153, %p154
      %p157 = scmp.ne.s32.totalorder %s142, %s156
      %p158 = scmp.eq.s32.totalorder %s27, 0
      %p159 = por %p157, %p158
      %s161 = sadd.s32 %s160, 1
      %p164 = scmp.eq.s32.totalorder %s21, 1
      %p165 = scmp.ne.s32.totalorder %s160, %s162
      %p166 = scmp.eq.s32.totalorder %s21, 0
      %p167 = por %p165, %p166
      %p168 = scmp.ne.s32.totalorder %s160, %s162
      %p169 = scmp.eq.s32.totalorder %s26, 1
      %p170 = por %p168, %p169
      %p171 = scmp.ne.s32.totalorder %s162, %s163
      %p172 = scmp.eq.s32.totalorder %s26, 0
      %p173 = por %p171, %p172
      %p174 = scmp.ne.s32.totalorder %s162, %s163
      %p175 = scmp.eq.s32.totalorder %s27, 1
      %p176 = por %p174, %p175
      %p178 = scmp.ne.s32.totalorder %s163, %s177
      %p179 = scmp.eq.s32.totalorder %s27, 0
      %p180 = por %p178, %p179
      %s181 = ssub.s32 %s28, %s40
      %s182 = ssub.s32 %s29, %s36
      %s183 = sor.u32 %s181, %s182
      %p184 = scmp.eq.s32.totalorder %s183, 0
      %s186 = sadd.s32 %s185, 1
      %s187 = scalar_select %p184, %s185, %s186
      %p190 = pneg %p184
      %p191 = scmp.eq.s32.totalorder %s21, 1
      %p192 = por %p190, %p191
      %p193 = scmp.ne.s32.totalorder %s185, %s188
      %p194 = scmp.eq.s32.totalorder %s21, 0
      %p195 = por %p193, %p194
      %p196 = scmp.ne.s32.totalorder %s185, %s188
      %p197 = scmp.eq.s32.totalorder %s26, 1
      %p198 = por %p196, %p197
      %p199 = scmp.ne.s32.totalorder %s188, %s189
      %p200 = scmp.eq.s32.totalorder %s26, 0
      %p201 = por %p199, %p200
      %p202 = scmp.ne.s32.totalorder %s188, %s189
      %p203 = scmp.eq.s32.totalorder %s27, 1
      %p204 = por %p202, %p203
      %p206 = scmp.ne.s32.totalorder %s189, %s205
      %p207 = scmp.eq.s32.totalorder %s27, 0
      %p208 = por %p206, %p207
      %p209 = scmp.le.s32.totalorder 1, %s21
      %p210 = scmp.lt.s32.totalorder %s21, 3
      %p211 = pnand %p209, %p210
      %p212 = pneg %p211
      // Predicated region
      $region9: #{tpu_custom_call.1} parent=5 // pred_check
        _
      $region10: #{tpu_custom_call.1} parent=5 // pred_check_branch
        %214 = sbr.rel (%p211) target = $region12
      $region11: #{tpu_custom_call.1} parent=5 // pred_region
        %s215 = ssub.s32 %s21, 1
        // Predicated region
        $region13: #{tpu_custom_call.1} parent=11 // pred_check
          %p216 = pneg %p110
        $region14: #{tpu_custom_call.1} parent=11 // pred_check_branch
          %218 = sbr.rel (%p216) target = $region16
        $region15: #{tpu_custom_call.1} parent=11 // pred_region
          _
        $region16: #{tpu_custom_call.1} parent=11 // pred_fallthru
          _
        // Predicated region
        $region17: #{tpu_custom_call.1} parent=11 // pred_check
          %p219 = pneg %p131
        $region18: #{tpu_custom_call.1} parent=11 // pred_check_branch
          %221 = sbr.rel (%p219) target = $region20
        $region19: #{tpu_custom_call.1} parent=11 // pred_region
          _
        $region20: #{tpu_custom_call.1} parent=11 // pred_fallthru
          _
        // Predicated region
        $region21: #{tpu_custom_call.1} parent=11 // pred_check
          %p222 = pneg %p152
        $region22: #{tpu_custom_call.1} parent=11 // pred_check_branch
          %224 = sbr.rel (%p222) target = $region24
        $region23: #{tpu_custom_call.1} parent=11 // pred_region
          _
        $region24: #{tpu_custom_call.1} parent=11 // pred_fallthru
          _
        // Predicated region
        $region25: #{tpu_custom_call.1} parent=11 // pred_check
          %p225 = pneg %p173
        $region26: #{tpu_custom_call.1} parent=11 // pred_check_branch
          %227 = sbr.rel (%p225) target = $region28
        $region27: #{tpu_custom_call.1} parent=11 // pred_region
          _
        $region28: #{tpu_custom_call.1} parent=11 // pred_fallthru
          _
      $region12: #{tpu_custom_call.1} parent=5 // pred_fallthru
        _
      %p228 = scmp.lt.s32.totalorder %s21, 2
      // Predicated region
      $region29: #{tpu_custom_call.1} parent=5 // pred_check
        %p229 = pneg %p228
      $region30: #{tpu_custom_call.1} parent=5 // pred_check_branch
        %231 = sbr.rel (%p229) target = $region32
      $region31: #{tpu_custom_call.1} parent=5 // pred_region
        // Predicated region
        $region33: #{tpu_custom_call.1} parent=31 // pred_check
          %p232 = pneg %p55
        $region34: #{tpu_custom_call.1} parent=31 // pred_check_branch
          %234 = sbr.rel (%p232) target = $region36
        $region35: #{tpu_custom_call.1} parent=31 // pred_region
          %s235 = sand.u32 %s45, 1
          %s236 = scalar_lea.sflag [#allocation3], %s235
          %s237 = sand.u32 %s45, 1
          %s238 = smul.addr %s237, 8
          %s239 = scalar_lea.vmem [#allocation2], %s238
          %s240 = smul.u32 2, %s29
          %s242 = ssub.s32 128, 128
          %243 = vsyncadd %s236, %s242
          %s244 = smul.addr %s28, 2
          %s245 = sadd.s32 %s240, %s244
          %s246 = smul.addr %s245, 64
          %s247 = scalar_lea.hbm %s0, %s246
          %s249 = sshll.u32 %s239, 4
          %s250 = int_to_ptr.vmem [resolvable:$true] %s249
          %252 = dma.hbm_to_vmem [thread:$0]  %s247, 128, %s250, %s236
        $region36: #{tpu_custom_call.1} parent=31 // pred_fallthru
          _
        // Predicated region
        $region37: #{tpu_custom_call.1} parent=31 // pred_check
          %p253 = pneg %p83
        $region38: #{tpu_custom_call.1} parent=31 // pred_check_branch
          %255 = sbr.rel (%p253) target = $region40
        $region39: #{tpu_custom_call.1} parent=31 // pred_region
          %s256 = sand.u32 %s73, 1
          %s257 = scalar_lea.sflag [#allocation6], %s256
          %s258 = sand.u32 %s73, 1
          %s259 = smul.addr %s258, 8
          %s260 = scalar_lea.vmem [#allocation5], %s259
          %s261 = smul.u32 2, %s29
          %s263 = ssub.s32 128, 128
          %264 = vsyncadd %s257, %s263
          %s265 = smul.addr %s28, 2
          %s266 = sadd.s32 %s261, %s265
          %s267 = smul.addr %s266, 64
          %s268 = scalar_lea.hbm %s1, %s267
          %s270 = sshll.u32 %s260, 4
          %s271 = int_to_ptr.vmem [resolvable:$true] %s270
          %273 = dma.hbm_to_vmem [thread:$0]  %s268, 128, %s271, %s257
        $region40: #{tpu_custom_call.1} parent=31 // pred_fallthru
          _
      $region32: #{tpu_custom_call.1} parent=5 // pred_fallthru
        _
      %p274 = scmp.le.s32.totalorder 1, %s21
      %p275 = scmp.lt.s32.totalorder %s21, 3
      %p276 = pnand %p274, %p275
      %p277 = pneg %p276
      // Predicated region
      $region41: #{tpu_custom_call.1} parent=5 // pred_check
        _
      $region42: #{tpu_custom_call.1} parent=5 // pred_check_branch
        %279 = sbr.rel (%p276) target = $region44
      $region43: #{tpu_custom_call.1} parent=5 // pred_region
        %s280 = ssub.s32 %s21, 1
        %s281 = sand.u32 %s48, 1
        %s282 = scalar_lea.sflag [#allocation3], %s281
        %s283 = sand.u32 %s48, 1
        %s284 = smul.addr %s283, 8
        %s285 = scalar_lea.vmem [#allocation2], %s284
        // Predicated region
        $region45: #{tpu_custom_call.1} parent=43 // pred_check
          %p286 = pneg %p61
        $region46: #{tpu_custom_call.1} parent=43 // pred_check_branch
          %288 = sbr.rel (%p286) target = $region48
        $region47: #{tpu_custom_call.1} parent=43 // pred_region
          %289 = dma.done %s282, 128
        $region48: #{tpu_custom_call.1} parent=43 // pred_fallthru
          _
        %s290 = sand.u32 %s76, 1
        %s291 = scalar_lea.sflag [#allocation6], %s290
        %s292 = sand.u32 %s76, 1
        %s293 = smul.addr %s292, 8
        %s294 = scalar_lea.vmem [#allocation5], %s293
        // Predicated region
        $region49: #{tpu_custom_call.1} parent=43 // pred_check
          %p295 = pneg %p89
        $region50: #{tpu_custom_call.1} parent=43 // pred_check_branch
          %297 = sbr.rel (%p295) target = $region52
        $region51: #{tpu_custom_call.1} parent=43 // pred_region
          %298 = dma.done %s291, 128
        $region52: #{tpu_custom_call.1} parent=43 // pred_fallthru
          _
        %s299 = sand.u32 %s48, 1
        %s300 = scalar_lea.sflag [#allocation3], %s299
        %s301 = sand.u32 %s48, 1
        %s302 = smul.addr %s301, 8
        %s303 = scalar_lea.vmem [#allocation2], %s302
        %p304 = pneg %p61
        %p305 = pneg %p58
        %s306 = sand.u32 %s76, 1
        %s307 = scalar_lea.sflag [#allocation6], %s306
        %s308 = sand.u32 %s76, 1
        %s309 = smul.addr %s308, 8
        %s310 = scalar_lea.vmem [#allocation5], %s309
        %p311 = pneg %p89
        %p312 = pneg %p86
        %p313 = pneg %p110
        %p314 = pneg %p107
        %p315 = pneg %p131
        %p316 = pneg %p128
        %p317 = pneg %p152
        %p318 = pneg %p149
        %p319 = pneg %p173
        %p320 = pneg %p170
        %p321 = pneg %p201
        %p322 = pneg %p198
        %s323 = sand.u32 %s188, 1
        %s324 = scalar_lea.sflag [#allocation4], %s323
        %s325 = sand.u32 %s188, 1
        %s326 = smul.addr %s325, 8
        %s327 = scalar_lea.vmem [#allocation7], %s326
        %s328 = smul.u32 2, %s31
        %s329 = smul.u32 2, %s31
        %s330 = smul.u32 2, %s31
        %v331 = vld [vmem:[%s285] sm:$0xff]
        %v332 = vld [vmem:[%s294] sm:$0xff]
        %v333 = vld [vmem:[%s2] sm:$0xf]
        %v334 = vld [vmem:[%s3] sm:$0xf]
        %v336 = vcombine.high %v332, %v332
        %vm337 = vcmask 31744
        %v339 = vsel %vm337, %v334, 0
        %vm341 = vcmask 1043456
        %v342 = vsel %vm341, %v332, 0
        %v344 = vsel %vm341, %v336, 0
        %346 = vmatprep.subr.mxu0 %v344
        %347 = vmatpush1.msra.mxu0 %v342
        %348 = vmatprep.subr.mxu0 0.0
        %349 = vmatpush1.msra.mxu0 0.0
        %350 = vmatprep.subr.mxu0 0.0
        %351 = vmatpush1.msra.mxu0 0.0
        %352 = vmatprep.subr.mxu0 0.0
        %353 = vmatpush1.msra.mxu0 0.0
        %354 = vmatprep.subr.mxu0 0.0
        %355 = vmatpush1.msra.mxu0 0.0
        %356 = vmatprep.subr.mxu0 0.0
        %357 = vmatpush1.msra.mxu0 0.0
        %358 = vmatprep.subr.mxu0 0.0
        %359 = vmatpush1.msra.mxu0 0.0
        %360 = vmatprep.subr.mxu0 0.0
        %361 = vmatpush1.msra.mxu0 0.0
        %362 = vmatprep.subr.mxu0 0.0
        %363 = vmatpush1.msra.mxu0 0.0
        %364 = vmatprep.subr.mxu0 0.0
        %365 = vmatpush1.msra.mxu0 0.0
        %366 = vmatprep.subr.mxu0 0.0
        %367 = vmatpush1.msra.mxu0 0.0
        %368 = vmatprep.subr.mxu0 0.0
        %369 = vmatpush1.msra.mxu0 0.0
        %370 = vmatprep.subr.mxu0 0.0
        %371 = vmatpush1.msra.mxu0 0.0
        %372 = vmatprep.subr.mxu0 0.0
        %373 = vmatpush1.msra.mxu0 0.0
        %374 = vmatprep.subr.mxu0 0.0
        %375 = vmatpush1.msra.mxu0 0.0
        %376 = vmatprep.subr.mxu0 0.0
        %377 = vmatpush1.msra.mxu0 0.0
        %378 = vmatprep.subr.mxu0 0.0
        %379 = vmatpush1.msra.mxu0 0.0
        %380 = vmatprep.subr.mxu0 0.0
        %381 = vmatpush1.msra.mxu0 0.0
        %382 = vmatprep.subr.mxu0 0.0
        %383 = vmatpush1.msra.mxu0 0.0
        %384 = vmatprep.subr.mxu0 0.0
        %385 = vmatpush1.msra.mxu0 0.0
        %386 = vmatprep.subr.mxu0 0.0
        %387 = vmatpush1.msra.mxu0 0.0
        %388 = vmatprep.subr.mxu0 0.0
        %389 = vmatpush1.msra.mxu0 0.0
        %390 = vmatprep.subr.mxu0 0.0
        %391 = vmatpush1.msra.mxu0 0.0
        %392 = vmatprep.subr.mxu0 0.0
        %393 = vmatpush1.msra.mxu0 0.0
        %394 = vmatprep.subr.mxu0 0.0
        %395 = vmatpush1.msra.mxu0 0.0
        %396 = vmatprep.subr.mxu0 0.0
        %397 = vmatpush1.msra.mxu0 0.0
        %398 = vmatprep.subr.mxu0 0.0
        %399 = vmatpush1.msra.mxu0 0.0
        %400 = vmatprep.subr.mxu0 0.0
        %401 = vmatpush1.msra.mxu0 0.0
        %402 = vmatprep.subr.mxu0 0.0
        %403 = vmatpush1.msra.mxu0 0.0
        %404 = vmatprep.subr.mxu0 0.0
        %405 = vmatpush1.msra.mxu0 0.0
        %406 = vmatprep.subr.mxu0 0.0
        %407 = vmatpush1.msra.mxu0 0.0
        %408 = vmatprep.subr.mxu0 0.0
        %409 = vmatpush1.msra.mxu0 0.0
        %410 = vmatprep.mubr.f32.mxu0 0.0
        %411 = vmatmul.mubr.f32.gmra.mrb[0].mxu0 %v339
        %v412 = vpop.f32.mrb[0].mxu0
        %v413 = vadd.f32 0.0, %v412
        %v414 = vpop.f32.mrb[0].mxu0
        %v415 = vadd.f32 0.0, %v414
        %416 = vdwg.mxu0
        %v418 = vcombine.high %v331, %v331
        %v420 = vsel %vm337, %v333, 0
        %v422 = vsel %vm341, %v331, 0
        %v424 = vsel %vm341, %v418, 0
        %426 = vmatprep.subr.mxu0 %v424
        %427 = vmatpush1.msra.mxu0 %v422
        %428 = vmatprep.subr.mxu0 0.0
        %429 = vmatpush1.msra.mxu0 0.0
        %430 = vmatprep.subr.mxu0 0.0
        %431 = vmatpush1.msra.mxu0 0.0
        %432 = vmatprep.subr.mxu0 0.0
        %433 = vmatpush1.msra.mxu0 0.0
        %434 = vmatprep.subr.mxu0 0.0
        %435 = vmatpush1.msra.mxu0 0.0
        %436 = vmatprep.subr.mxu0 0.0
        %437 = vmatpush1.msra.mxu0 0.0
        %438 = vmatprep.subr.mxu0 0.0
        %439 = vmatpush1.msra.mxu0 0.0
        %440 = vmatprep.subr.mxu0 0.0
        %441 = vmatpush1.msra.mxu0 0.0
        %442 = vmatprep.subr.mxu0 0.0
        %443 = vmatpush1.msra.mxu0 0.0
        %444 = vmatprep.subr.mxu0 0.0
        %445 = vmatpush1.msra.mxu0 0.0
        %446 = vmatprep.subr.mxu0 0.0
        %447 = vmatpush1.msra.mxu0 0.0
        %448 = vmatprep.subr.mxu0 0.0
        %449 = vmatpush1.msra.mxu0 0.0
        %450 = vmatprep.subr.mxu0 0.0
        %451 = vmatpush1.msra.mxu0 0.0
        %452 = vmatprep.subr.mxu0 0.0
        %453 = vmatpush1.msra.mxu0 0.0
        %454 = vmatprep.subr.mxu0 0.0
        %455 = vmatpush1.msra.mxu0 0.0
        %456 = vmatprep.subr.mxu0 0.0
        %457 = vmatpush1.msra.mxu0 0.0
        %458 = vmatprep.subr.mxu0 0.0
        %459 = vmatpush1.msra.mxu0 0.0
        %460 = vmatprep.subr.mxu0 0.0
        %461 = vmatpush1.msra.mxu0 0.0
        %462 = vmatprep.subr.mxu0 0.0
        %463 = vmatpush1.msra.mxu0 0.0
        %464 = vmatprep.subr.mxu0 0.0
        %465 = vmatpush1.msra.mxu0 0.0
        %466 = vmatprep.subr.mxu0 0.0
        %467 = vmatpush1.msra.mxu0 0.0
        %468 = vmatprep.subr.mxu0 0.0
        %469 = vmatpush1.msra.mxu0 0.0
        %470 = vmatprep.subr.mxu0 0.0
        %471 = vmatpush1.msra.mxu0 0.0
        %472 = vmatprep.subr.mxu0 0.0
        %473 = vmatpush1.msra.mxu0 0.0
        %474 = vmatprep.subr.mxu0 0.0
        %475 = vmatpush1.msra.mxu0 0.0
        %476 = vmatprep.subr.mxu0 0.0
        %477 = vmatpush1.msra.mxu0 0.0
        %478 = vmatprep.subr.mxu0 0.0
        %479 = vmatpush1.msra.mxu0 0.0
        %480 = vmatprep.subr.mxu0 0.0
        %481 = vmatpush1.msra.mxu0 0.0
        %482 = vmatprep.subr.mxu0 0.0
        %483 = vmatpush1.msra.mxu0 0.0
        %484 = vmatprep.subr.mxu0 0.0
        %485 = vmatpush1.msra.mxu0 0.0
        %486 = vmatprep.subr.mxu0 0.0
        %487 = vmatpush1.msra.mxu0 0.0
        %488 = vmatprep.subr.mxu0 0.0
        %489 = vmatpush1.msra.mxu0 0.0
        %490 = vmatprep.mubr.f32.mxu0 0.0
        %491 = vmatmul.mubr.f32.gmra.mrb[0].mxu0 %v420
        %v492 = vpop.f32.mrb[0].mxu0
        %v493 = vadd.f32 %v413, %v492
        %v494 = vpop.f32.mrb[0].mxu0
        %v495 = vadd.f32 %v415, %v494
        %496 = vdwg.mxu0
        %v497 = vld [vmem:[%s4] sm:$0xf]
        %499 = vset.pattern.permute.xlu0 0
        %500 = vperm.xlu0 %499, %v497
        %v501 = vpop.permute.xlu0 %500
        %v503 = vadd.f32 %v493, %v501
        %v504 = vadd.f32 %v495, %v501
        %v505 = vmax.f32 %v503, 0.0
        %v506 = vmax.f32 %v504, 0.0
        %v507 = vld [vmem:[%s5] sm:$0xf]
        %v509 = vsel %vm337, %v507, 0
        %v512 = vsel %vm341, %v505, 0
        %v515 = vsel %vm341, %v506, 0
        %517 = vmatprep.subr.mxu0 %v515
        %518 = vmatpush1.msra.mxu0 %v512
        %519 = vmatprep.subr.mxu0 0.0
        %520 = vmatpush1.msra.mxu0 0.0
        %521 = vmatprep.subr.mxu0 0.0
        %522 = vmatpush1.msra.mxu0 0.0
        %523 = vmatprep.subr.mxu0 0.0
        %524 = vmatpush1.msra.mxu0 0.0
        %525 = vmatprep.subr.mxu0 0.0
        %526 = vmatpush1.msra.mxu0 0.0
        %527 = vmatprep.subr.mxu0 0.0
        %528 = vmatpush1.msra.mxu0 0.0
        %529 = vmatprep.subr.mxu0 0.0
        %530 = vmatpush1.msra.mxu0 0.0
        %531 = vmatprep.subr.mxu0 0.0
        %532 = vmatpush1.msra.mxu0 0.0
        %533 = vmatprep.subr.mxu0 0.0
        %534 = vmatpush1.msra.mxu0 0.0
        %535 = vmatprep.subr.mxu0 0.0
        %536 = vmatpush1.msra.mxu0 0.0
        %537 = vmatprep.subr.mxu0 0.0
        %538 = vmatpush1.msra.mxu0 0.0
        %539 = vmatprep.subr.mxu0 0.0
        %540 = vmatpush1.msra.mxu0 0.0
        %541 = vmatprep.subr.mxu0 0.0
        %542 = vmatpush1.msra.mxu0 0.0
        %543 = vmatprep.subr.mxu0 0.0
        %544 = vmatpush1.msra.mxu0 0.0
        %545 = vmatprep.subr.mxu0 0.0
        %546 = vmatpush1.msra.mxu0 0.0
        %547 = vmatprep.subr.mxu0 0.0
        %548 = vmatpush1.msra.mxu0 0.0
        %549 = vmatprep.subr.mxu0 0.0
        %550 = vmatpush1.msra.mxu0 0.0
        %551 = vmatprep.subr.mxu0 0.0
        %552 = vmatpush1.msra.mxu0 0.0
        %553 = vmatprep.subr.mxu0 0.0
        %554 = vmatpush1.msra.mxu0 0.0
        %555 = vmatprep.subr.mxu0 0.0
        %556 = vmatpush1.msra.mxu0 0.0
        %557 = vmatprep.subr.mxu0 0.0
        %558 = vmatpush1.msra.mxu0 0.0
        %559 = vmatprep.subr.mxu0 0.0
        %560 = vmatpush1.msra.mxu0 0.0
        %561 = vmatprep.subr.mxu0 0.0
        %562 = vmatpush1.msra.mxu0 0.0
        %563 = vmatprep.subr.mxu0 0.0
        %564 = vmatpush1.msra.mxu0 0.0
        %565 = vmatprep.subr.mxu0 0.0
        %566 = vmatpush1.msra.mxu0 0.0
        %567 = vmatprep.subr.mxu0 0.0
        %568 = vmatpush1.msra.mxu0 0.0
        %569 = vmatprep.subr.mxu0 0.0
        %570 = vmatpush1.msra.mxu0 0.0
        %571 = vmatprep.subr.mxu0 0.0
        %572 = vmatpush1.msra.mxu0 0.0
        %573 = vmatprep.subr.mxu0 0.0
        %574 = vmatpush1.msra.mxu0 0.0
        %575 = vmatprep.subr.mxu0 0.0
        %576 = vmatpush1.msra.mxu0 0.0
        %577 = vmatprep.subr.mxu0 0.0
        %578 = vmatpush1.msra.mxu0 0.0
        %579 = vmatprep.subr.mxu0 0.0
        %580 = vmatpush1.msra.mxu0 0.0
        %581 = vmatprep.mubr.f32.mxu0 0.0
        %582 = vmatmul.mubr.f32.gmra.mrb[0].mxu0 %v509
        %v583 = vpop.f32.mrb[0].mxu0
        %v584 = vadd.f32 0.0, %v583
        %v585 = vpop.f32.mrb[0].mxu0
        %v586 = vadd.f32 0.0, %v585
        %587 = vdwg.mxu0
        %v589 = vmul.f32 %v584, %v331
        %v590 = vmul.f32 %v586, %v418
        %v593 = vcombine.low %v589, %v590
        %595 = vst [vmem:[%s327] sm:$0xff] %v593
        %s596 = sand.u32 %s188, 1
        %s597 = scalar_lea.sflag [#allocation4], %s596
        %s598 = sand.u32 %s188, 1
        %s599 = smul.addr %s598, 8
        %s600 = scalar_lea.vmem [#allocation7], %s599
        // Predicated region
        $region53: #{tpu_custom_call.1} parent=43 // pred_check
          %p601 = pneg %p198
        $region54: #{tpu_custom_call.1} parent=43 // pred_check_branch
          %603 = sbr.rel (%p601) target = $region56
        $region55: #{tpu_custom_call.1} parent=43 // pred_region
          %s604 = smul.u32 2, %s31
          %s606 = ssub.s32 128, 128
          %607 = vsyncadd %s597, %s606
          %s608 = smul.addr %s30, 2
          %s609 = sadd.s32 %s604, %s608
          %s610 = smul.addr %s609, 64
          %s611 = scalar_lea.hbm %s6, %s610
          %s613 = sshll.u32 %s600, 4
          %s614 = int_to_ptr.vmem [resolvable:$true] %s613
          %616 = dma.vmem_to_hbm [thread:$0]  %s614, 128, %s611, %s597
        $region56: #{tpu_custom_call.1} parent=43 // pred_fallthru
          _
      $region44: #{tpu_custom_call.1} parent=5 // pred_fallthru
        _
      %p617 = scmp.le.s32.totalorder 2, %s21
      // Predicated region
      $region57: #{tpu_custom_call.1} parent=5 // pred_check
        %p618 = pneg %p617
      $region58: #{tpu_custom_call.1} parent=5 // pred_check_branch
        %620 = sbr.rel (%p618) target = $region60
      $region59: #{tpu_custom_call.1} parent=5 // pred_region
        %s621 = ssub.s32 %s21, 2
        // Predicated region
        $region61: #{tpu_custom_call.1} parent=59 // pred_check
          %p622 = pneg %p204
        $region62: #{tpu_custom_call.1} parent=59 // pred_check_branch
          %624 = sbr.rel (%p622) target = $region64
        $region63: #{tpu_custom_call.1} parent=59 // pred_region
          %s625 = sand.u32 %s189, 1
          %s626 = scalar_lea.sflag [#allocation4], %s625
          %s627 = sand.u32 %s189, 1
          %s628 = smul.addr %s627, 8
          %s629 = scalar_lea.vmem [#allocation7], %s628
          %630 = dma.done %s626, 128
        $region64: #{tpu_custom_call.1} parent=59 // pred_fallthru
          _
      $region60: #{tpu_custom_call.1} parent=5 // pred_fallthru
        _
    $region6: #{tpu_custom_call.1} parent=1 // loop_footer
      %s25 = sadd.s32 1, %s21
    $region7: #{tpu_custom_call.1} parent=1 // loop_footer_branch
      %20 = sbr.rel target = $region3
    $region8: #{tpu_custom_call.1} parent=1 // loop_exit
      _
    %631 = vsyncpa [#allocation3], 1
    %s632 = scalar_lea.sflag [#allocation3], 1
    %633 = vsyncpa %s632, 1
    %634 = vsyncpa [#allocation6], 1
    %s635 = scalar_lea.sflag [#allocation6], 1
    %636 = vsyncpa %s635, 1
    %637 = vsyncpa [#allocation4], 1
    %s638 = scalar_lea.sflag [#allocation4], 1
    %639 = vsyncpa %s638, 1

</llo_original>
